<compile_context>
chip_gen: v7x
topology: tpu7x:2x2x1
jax: 0.10.0
libtpu: 0.0.40
codegen_flags: <defaults>
</compile_context>

<pallas_src>
import functools

import jax
import jax.numpy as jnp
from jax.experimental import pallas as pl
from jax.experimental.pallas import tpu as pltpu


# ----------------------------- kernel ---------------------------------------

def _scale_cast_kernel(x_ref, o_ref, *, scale):
    # Elementwise hot path: widen to f32 (safe on v5e: no bf16 VPU path there),
    # scale, cast to the output dtype.  HBM-bound, so the VPU work is free.
    x = x_ref[...].astype(jnp.float32)
    o_ref[...] = (x * jnp.float32(scale)).astype(o_ref.dtype)


# ----------------------------- wrapper ---------------------------------------

_LANES = 512                    # lane-dense width: big multiple of 128 -> unmasked vst
_XLA_FALLBACK_ELEMS = 1 << 20   # below this, pallas_call launch overhead dominates


def _round_up(x: int, m: int) -> int:
    return ((x + m - 1) // m) * m


def _max_tile_rows() -> int:
    """Largest block row count whose double-buffered in+out tiles fit the
    scoped-VMEM default of the current TPU generation."""
    try:
        kind = jax.devices()[0].device_kind.lower()
    except Exception:  # defensive: backend query failed
        kind = ""
    if "v7" in kind:
        # 4096x512: 2 MiB uint8-in + 8 MiB f32-out, double buffered ~= 20 MiB
        # -> fits v7x's 32 MiB scoped default; amortizes per-step overhead at
        # ~3.2 TB/s HBM.
        return 4096
    # 2048x512: 1 MiB in + 4 MiB out, double buffered ~= 10 MiB -> fits even
    # v5e's 16 MiB scoped-VMEM default (and v6e's 32 MiB trivially).
    return 2048


def _xla_scale_cast(image, scale, out_dtype):
    return (image.astype(jnp.float32) * jnp.float32(scale)).astype(out_dtype)


def convert_image_dtype(image, dtype=jnp.float32, *, min_pallas_elems=_XLA_FALLBACK_ELEMS):
    """JAX/Pallas equivalent of torchvision F.convert_image_dtype.

    Supports int -> float (scale by 1/max_int) and float -> float (pure cast).
    """
    in_dtype = image.dtype
    out_dtype = jnp.dtype(dtype)

    if in_dtype == out_dtype:
        return image

    if jnp.issubdtype(in_dtype, jnp.floating) and jnp.issubdtype(out_dtype, jnp.floating):
        # Pure cast: no multiply needed; let XLA fuse it with producer/consumer.
        return image.astype(out_dtype)

    if not (jnp.issubdtype(in_dtype, jnp.integer) and jnp.issubdtype(out_dtype, jnp.floating)):
        # TODO(synk): float->int and int->int paths of convert_image_dtype
        # (saturating scale / eps clamp and integer rescale) not implemented.
        raise NotImplementedError("only int->float and float->float supported")

    # int -> float: scale by 1 / max_int.
    # TODO(synk): for >24-bit int inputs the f32 multiply loses precision above
    # 2^24 (matches torchvision's float32 behaviour, but not exact).
    scale = 1.0 / float(jnp.iinfo(in_dtype).max)

    orig_shape = image.shape
    n = image.size

    # Small images, or element counts that do not divide the lane width: use
    # the fused XLA path.  For ragged n the alternatives (whole-array pad +
    # output [:n] slice, or split + concat) each re-read/re-write the full
    # array, inflating HBM traffic well past what the plain fusion does.
    if n < min_pallas_elems or n % _LANES != 0:
        return _xla_scale_cast(image, scale, out_dtype)

    rows = n // _LANES
    # tile_rows: multiple of 32 so uint8/int8 sublane packing and the f32
    # (8,128) tile both divide the block cleanly; capped per generation.
    tile_rows = min(_max_tile_rows(), _round_up(rows, 32))
    num_tiles = pl.cdiv(rows, tile_rows)      # ragged last block masked by Pallas

    x2d = image.reshape(rows, _LANES)         # zero-copy lane-dense view

    in_bytes = jnp.dtype(in_dtype).itemsize
    out_bytes = out_dtype.itemsize
    cost = pl.CostEstimate(
        flops=n, transcendentals=0, bytes_accessed=n * (in_bytes + out_bytes))

    # TODO(synk): optionally sweep pipeline_mode=pl.Buffered(3) on the input
    # BlockSpec (the uint8 input buffer is cheap); <5% expected, left default.
    out2d = pl.pallas_call(
        functools.partial(_scale_cast_kernel, scale=scale),
        out_shape=jax.ShapeDtypeStruct((rows, _LANES), out_dtype),
        grid=(num_tiles,),
        in_specs=[pl.BlockSpec((tile_rows, _LANES), lambda i: (i, 0))],
        out_specs=pl.BlockSpec((tile_rows, _LANES), lambda i: (i, 0)),
        compiler_params=pltpu.CompilerParams(
            dimension_semantics=("parallel",),  # shard tile loop across TCs on v7x
        ),
        cost_estimate=cost,
    )(x2d)

    return out2d.reshape(orig_shape)


class ConvertImageDtype:
    """Mirror of the PyTorch nn.Module: forward(image, target) -> (image, target)."""

    def __init__(self, dtype) -> None:
        self.dtype = dtype

    def __call__(self, image, target=None):
        image = convert_image_dtype(image, self.dtype)
        return image, target


if __name__ == "__main__":
    key = jax.random.PRNGKey(0)
    k1, k2, k3 = jax.random.split(key, 3)

    mod = ConvertImageDtype(jnp.float32)

    # 1) Small uint8 NCHW image: batch=2, channels=4, 16x16 -> fused XLA path.
    x_small = jax.random.randint(k1, (2, 4, 16, 16), 0, 256, dtype=jnp.int32).astype(jnp.uint8)
    y_small, tgt = mod(x_small, target=None)
    y_small = jax.block_until_ready(y_small)
    assert y_small.shape == x_small.shape
    assert y_small.dtype == jnp.float32
    assert tgt is None
    assert jnp.allclose(y_small, x_small.astype(jnp.float32) / 255.0, atol=1e-6)

    # 2) Lane-divisible image (2*4*128*128 = 131072 elements): force the Pallas
    #    path (the default threshold only engages it for >= 1M-element images).
    x_big = jax.random.randint(k2, (2, 4, 128, 128), 0, 256, dtype=jnp.int32).astype(jnp.uint8)
    y_big = convert_image_dtype(x_big, jnp.float32, min_pallas_elems=0)
    y_big = jax.block_until_ready(y_big)
    assert y_big.shape == x_big.shape
    assert y_big.dtype == jnp.float32
    assert jnp.allclose(y_big, x_big.astype(jnp.float32) / 255.0, atol=1e-6)

    # 3) Ragged element count (not a multiple of 512) -> XLA fallback path.
    x_odd = jax.random.randint(k3, (3, 3, 7, 5), 0, 256, dtype=jnp.int32).astype(jnp.uint8)
    y_odd, _ = mod(x_odd, target=None)
    y_odd = jax.block_until_ready(y_odd)
    assert jnp.allclose(y_odd, x_odd.astype(jnp.float32) / 255.0, atol=1e-6)

    print("KERNEL_OK")
</pallas_src>

<mosaic_0001>
module attributes {stable_mosaic.version = 11 : i64} {
  func.func @_scale_cast_kernel(%arg0: i32, %arg1: memref<256x512xi8, #tpu.memory_space<vmem>>, %arg2: memref<256x512xf32, #tpu.memory_space<vmem>>) attributes {dimension_semantics = [#tpu.dimension_semantics<parallel>], iteration_bounds = array<i64: 1>, scalar_prefetch = 0 : i64, scratch_operands = 0 : i64, tpu.core_type = #tpu.core_type<tc>, window_params = [{transform_indices = @transform_0, window_bounds = array<i64: 256, 512>}, {transform_indices = @transform_1, window_bounds = array<i64: 256, 512>}]} {
    %c0 = arith.constant 0 : index
    %c0_0 = arith.constant 0 : index
    %0 = vector.load %arg1[%c0, %c0_0] : memref<256x512xi8, #tpu.memory_space<vmem>>, vector<256x512xi8>
    %1 = arith.uitofp %0 : vector<256x512xi8> to vector<256x512xf32>
    %cst = arith.constant 0.00392156886 : f32
    %2 = vector.broadcast %cst : f32 to vector<256x512xf32>
    %3 = arith.mulf %1, %2 : vector<256x512xf32>
    %c0_1 = arith.constant 0 : index
    %c0_2 = arith.constant 0 : index
    %4 = vector.load %arg2[%c0_1, %c0_2] : memref<256x512xf32, #tpu.memory_space<vmem>>, vector<256x512xf32>
    tpu.vector_store %arg2[%c0_1, %c0_2], %3 {strides = array<i32>} : memref<256x512xf32, #tpu.memory_space<vmem>>, vector<256x512xf32>,
    return
  }
  func.func @transform_0(%arg0: i32) -> (i32, i32) {
    %c0_i32 = arith.constant 0 : i32
    %c0_i32_0 = arith.constant 0 : i32
    return %arg0, %c0_i32 : i32, i32
  }
  func.func @transform_1(%arg0: i32) -> (i32, i32) {
    %c0_i32 = arith.constant 0 : i32
    %c0_i32_0 = arith.constant 0 : i32
    return %arg0, %c0_i32 : i32, i32
  }
}

</mosaic_0001>

<llo_original>
// kernel: tpu_custom_call.1
$region0: #{tpu_custom_call.1}
  #allocation0 [shape = 'u32[]', space=smem, size = 0x4, offset = 0x4, fixed_abs, tag = 'smem constant byte address 0x4 - core index']
  #allocation1 [shape = 'u32[144,128]{1,0:T(1,128)}', space=vmem, size = 0x12000, scoped, tag = 'internal scratch']
  %s0 = inlined_call_operand.hbm [shape: u8[256,512], index: 0, kind: input, shape index: {}]
  %s1 = inlined_call_operand.hbm [shape: f32[256,512], index: 1, kind: output, shape index: {}]
  %s2 = sld [smem:[#allocation0]]
  $region18: #{tpu_custom_call.1} parent=0
    _
  %s4 = ssub.s32 1, %s2
  %s5 = scalar_select 0, %s4, %s2
  $region1: #{tpu_custom_call.1} parent=0
    #allocation2 [shape = 'u8[131072]{0}', space=vmem, size = 0x20000, scoped, tag = 'input window, operand 0, single buffered']
    #allocation3 [shape = 's32[1]{0}', space=sflag, size = 0x4, scoped, tag = 'scoped memory for tpu_custom_call.1']
    #allocation4 [shape = 's32[1]{0}', space=sflag, size = 0x4, scoped, tag = 'scoped memory for tpu_custom_call.1']
    #allocation5 [shape = 'u8[524288]{0}', space=vmem, size = 0x80000, scoped, tag = 'output window, operand 0, single buffered']
    %6 = vsyncpa [#allocation3], 0
    %7 = vsyncpa [#allocation4], 0
    // Predicated region
    $region2: #{tpu_custom_call.1} parent=1 // pred_check
      _
    $region3: #{tpu_custom_call.1} parent=1 // pred_check_branch
      %9 = sbr.rel (0) target = $region5
    $region4: #{tpu_custom_call.1} parent=1 // pred_region
      %s11 = ssub.s32 4096, 4096
      %12 = vsyncadd [#allocation3], %s11
      %s13 = sshll.u32 [#allocation2], 4
      %s14 = int_to_ptr.vmem [resolvable:$true] %s13
      %19 = dma.hbm_to_vmem [thread:$0]  %s0, 4096, %s14, [#allocation3], 512, 512, 32
    $region5: #{tpu_custom_call.1} parent=1 // pred_fallthru
      _
    // Predicated region
    $region6: #{tpu_custom_call.1} parent=1 // pred_check
      _
    $region7: #{tpu_custom_call.1} parent=1 // pred_check_branch
      %21 = sbr.rel (0) target = $region9
    $region8: #{tpu_custom_call.1} parent=1 // pred_region
      %22 = dma.done [#allocation3], 4096
    $region9: #{tpu_custom_call.1} parent=1 // pred_fallthru
      _
    %v23 = vld [vmem:[#allocation2] sm:$0xff]
    %v24 = vld [vmem:[#allocation2 + $0x8] sm:$0xff]
    %v25 = vld [vmem:[#allocation2 + $0x10] sm:$0xff]
    %v26 = vld [vmem:[#allocation2 + $0x18] sm:$0xff]
    %v27 = vld [vmem:[#allocation2 + $0x20] sm:$0xff]
    %v28 = vld [vmem:[#allocation2 + $0x28] sm:$0xff]
    %v29 = vld [vmem:[#allocation2 + $0x30] sm:$0xff]
    %v30 = vld [vmem:[#allocation2 + $0x38] sm:$0xff]
    %v31 = vld [vmem:[#allocation2 + $0x40] sm:$0xff]
    %v32 = vld [vmem:[#allocation2 + $0x48] sm:$0xff]
    %v33 = vld [vmem:[#allocation2 + $0x50] sm:$0xff]
    %v34 = vld [vmem:[#allocation2 + $0x58] sm:$0xff]
    %v35 = vld [vmem:[#allocation2 + $0x60] sm:$0xff]
    %v36 = vld [vmem:[#allocation2 + $0x68] sm:$0xff]
    %v37 = vld [vmem:[#allocation2 + $0x70] sm:$0xff]
    %v38 = vld [vmem:[#allocation2 + $0x78] sm:$0xff]
    %v39 = vld [vmem:[#allocation2 + $0x80] sm:$0xff]
    %v40 = vld [vmem:[#allocation2 + $0x88] sm:$0xff]
    %v41 = vld [vmem:[#allocation2 + $0x90] sm:$0xff]
    %v42 = vld [vmem:[#allocation2 + $0x98] sm:$0xff]
    %v43 = vld [vmem:[#allocation2 + $0xa0] sm:$0xff]
    %v44 = vld [vmem:[#allocation2 + $0xa8] sm:$0xff]
    %v45 = vld [vmem:[#allocation2 + $0xb0] sm:$0xff]
    %v46 = vld [vmem:[#allocation2 + $0xb8] sm:$0xff]
    %v47 = vld [vmem:[#allocation2 + $0xc0] sm:$0xff]
    %v48 = vld [vmem:[#allocation2 + $0xc8] sm:$0xff]
    %v49 = vld [vmem:[#allocation2 + $0xd0] sm:$0xff]
    %v50 = vld [vmem:[#allocation2 + $0xd8] sm:$0xff]
    %v51 = vld [vmem:[#allocation2 + $0xe0] sm:$0xff]
    %v52 = vld [vmem:[#allocation2 + $0xe8] sm:$0xff]
    %v53 = vld [vmem:[#allocation2 + $0xf0] sm:$0xff]
    %v54 = vld [vmem:[#allocation2 + $0xf8] sm:$0xff]
    %v55 = vunpack.c.0.s8 %v23
    %v56 = vunpack.c.0.s8 %v24
    %v57 = vunpack.c.0.s8 %v25
    %v58 = vunpack.c.0.s8 %v26
    %v59 = vunpack.c.1.s8 %v23
    %v60 = vunpack.c.1.s8 %v24
    %v61 = vunpack.c.1.s8 %v25
    %v62 = vunpack.c.1.s8 %v26
    %v63 = vunpack.c.2.s8 %v23
    %v64 = vunpack.c.2.s8 %v24
    %v65 = vunpack.c.2.s8 %v25
    %v66 = vunpack.c.2.s8 %v26
    %v67 = vunpack.c.3.s8 %v23
    %v68 = vunpack.c.3.s8 %v24
    %v69 = vunpack.c.3.s8 %v25
    %v70 = vunpack.c.3.s8 %v26
    %v71 = vunpack.c.0.s8 %v27
    %v72 = vunpack.c.0.s8 %v28
    %v73 = vunpack.c.0.s8 %v29
    %v74 = vunpack.c.0.s8 %v30
    %v75 = vunpack.c.1.s8 %v27
    %v76 = vunpack.c.1.s8 %v28
    %v77 = vunpack.c.1.s8 %v29
    %v78 = vunpack.c.1.s8 %v30
    %v79 = vunpack.c.2.s8 %v27
    %v80 = vunpack.c.2.s8 %v28
    %v81 = vunpack.c.2.s8 %v29
    %v82 = vunpack.c.2.s8 %v30
    %v83 = vunpack.c.3.s8 %v27
    %v84 = vunpack.c.3.s8 %v28
    %v85 = vunpack.c.3.s8 %v29
    %v86 = vunpack.c.3.s8 %v30
    %v87 = vunpack.c.0.s8 %v31
    %v88 = vunpack.c.0.s8 %v32
    %v89 = vunpack.c.0.s8 %v33
    %v90 = vunpack.c.0.s8 %v34
    %v91 = vunpack.c.1.s8 %v31
    %v92 = vunpack.c.1.s8 %v32
    %v93 = vunpack.c.1.s8 %v33
    %v94 = vunpack.c.1.s8 %v34
    %v95 = vunpack.c.2.s8 %v31
    %v96 = vunpack.c.2.s8 %v32
    %v97 = vunpack.c.2.s8 %v33
    %v98 = vunpack.c.2.s8 %v34
    %v99 = vunpack.c.3.s8 %v31
    %v100 = vunpack.c.3.s8 %v32
    %v101 = vunpack.c.3.s8 %v33
    %v102 = vunpack.c.3.s8 %v34
    %v103 = vunpack.c.0.s8 %v35
    %v104 = vunpack.c.0.s8 %v36
    %v105 = vunpack.c.0.s8 %v37
    %v106 = vunpack.c.0.s8 %v38
    %v107 = vunpack.c.1.s8 %v35
    %v108 = vunpack.c.1.s8 %v36
    %v109 = vunpack.c.1.s8 %v37
    %v110 = vunpack.c.1.s8 %v38
    %v111 = vunpack.c.2.s8 %v35
    %v112 = vunpack.c.2.s8 %v36
    %v113 = vunpack.c.2.s8 %v37
    %v114 = vunpack.c.2.s8 %v38
    %v115 = vunpack.c.3.s8 %v35
    %v116 = vunpack.c.3.s8 %v36
    %v117 = vunpack.c.3.s8 %v37
    %v118 = vunpack.c.3.s8 %v38
    %v119 = vunpack.c.0.s8 %v39
    %v120 = vunpack.c.0.s8 %v40
    %v121 = vunpack.c.0.s8 %v41
    %v122 = vunpack.c.0.s8 %v42
    %v123 = vunpack.c.1.s8 %v39
    %v124 = vunpack.c.1.s8 %v40
    %v125 = vunpack.c.1.s8 %v41
    %v126 = vunpack.c.1.s8 %v42
    %v127 = vunpack.c.2.s8 %v39
    %v128 = vunpack.c.2.s8 %v40
    %v129 = vunpack.c.2.s8 %v41
    %v130 = vunpack.c.2.s8 %v42
    %v131 = vunpack.c.3.s8 %v39
    %v132 = vunpack.c.3.s8 %v40
    %v133 = vunpack.c.3.s8 %v41
    %v134 = vunpack.c.3.s8 %v42
    %v135 = vunpack.c.0.s8 %v43
    %v136 = vunpack.c.0.s8 %v44
    %v137 = vunpack.c.0.s8 %v45
    %v138 = vunpack.c.0.s8 %v46
    %v139 = vunpack.c.1.s8 %v43
    %v140 = vunpack.c.1.s8 %v44
    %v141 = vunpack.c.1.s8 %v45
    %v142 = vunpack.c.1.s8 %v46
    %v143 = vunpack.c.2.s8 %v43
    %v144 = vunpack.c.2.s8 %v44
    %v145 = vunpack.c.2.s8 %v45
    %v146 = vunpack.c.2.s8 %v46
    %v147 = vunpack.c.3.s8 %v43
    %v148 = vunpack.c.3.s8 %v44
    %v149 = vunpack.c.3.s8 %v45
    %v150 = vunpack.c.3.s8 %v46
    %v151 = vunpack.c.0.s8 %v47
    %v152 = vunpack.c.0.s8 %v48
    %v153 = vunpack.c.0.s8 %v49
    %v154 = vunpack.c.0.s8 %v50
    %v155 = vunpack.c.1.s8 %v47
    %v156 = vunpack.c.1.s8 %v48
    %v157 = vunpack.c.1.s8 %v49
    %v158 = vunpack.c.1.s8 %v50
    %v159 = vunpack.c.2.s8 %v47
    %v160 = vunpack.c.2.s8 %v48
    %v161 = vunpack.c.2.s8 %v49
    %v162 = vunpack.c.2.s8 %v50
    %v163 = vunpack.c.3.s8 %v47
    %v164 = vunpack.c.3.s8 %v48
    %v165 = vunpack.c.3.s8 %v49
    %v166 = vunpack.c.3.s8 %v50
    %v167 = vunpack.c.0.s8 %v51
    %v168 = vunpack.c.0.s8 %v52
    %v169 = vunpack.c.0.s8 %v53
    %v170 = vunpack.c.0.s8 %v54
    %v171 = vunpack.c.1.s8 %v51
    %v172 = vunpack.c.1.s8 %v52
    %v173 = vunpack.c.1.s8 %v53
    %v174 = vunpack.c.1.s8 %v54
    %v175 = vunpack.c.2.s8 %v51
    %v176 = vunpack.c.2.s8 %v52
    %v177 = vunpack.c.2.s8 %v53
    %v178 = vunpack.c.2.s8 %v54
    %v179 = vunpack.c.3.s8 %v51
    %v180 = vunpack.c.3.s8 %v52
    %v181 = vunpack.c.3.s8 %v53
    %v182 = vunpack.c.3.s8 %v54
    %v183 = vand.u32 %v55, 255
    %v184 = vand.u32 %v56, 255
    %v185 = vand.u32 %v57, 255
    %v186 = vand.u32 %v58, 255
    %v187 = vand.u32 %v59, 255
    %v188 = vand.u32 %v60, 255
    %v189 = vand.u32 %v61, 255
    %v190 = vand.u32 %v62, 255
    %v191 = vand.u32 %v63, 255
    %v192 = vand.u32 %v64, 255
    %v193 = vand.u32 %v65, 255
    %v194 = vand.u32 %v66, 255
    %v195 = vand.u32 %v67, 255
    %v196 = vand.u32 %v68, 255
    %v197 = vand.u32 %v69, 255
    %v198 = vand.u32 %v70, 255
    %v199 = vand.u32 %v71, 255
    %v200 = vand.u32 %v72, 255
    %v201 = vand.u32 %v73, 255
    %v202 = vand.u32 %v74, 255
    %v203 = vand.u32 %v75, 255
    %v204 = vand.u32 %v76, 255
    %v205 = vand.u32 %v77, 255
    %v206 = vand.u32 %v78, 255
    %v207 = vand.u32 %v79, 255
    %v208 = vand.u32 %v80, 255
    %v209 = vand.u32 %v81, 255
    %v210 = vand.u32 %v82, 255
    %v211 = vand.u32 %v83, 255
    %v212 = vand.u32 %v84, 255
    %v213 = vand.u32 %v85, 255
    %v214 = vand.u32 %v86, 255
    %v215 = vand.u32 %v87, 255
    %v216 = vand.u32 %v88, 255
    %v217 = vand.u32 %v89, 255
    %v218 = vand.u32 %v90, 255
    %v219 = vand.u32 %v91, 255
    %v220 = vand.u32 %v92, 255
    %v221 = vand.u32 %v93, 255
    %v222 = vand.u32 %v94, 255
    %v223 = vand.u32 %v95, 255
    %v224 = vand.u32 %v96, 255
    %v225 = vand.u32 %v97, 255
    %v226 = vand.u32 %v98, 255
    %v227 = vand.u32 %v99, 255
    %v228 = vand.u32 %v100, 255
    %v229 = vand.u32 %v101, 255
    %v230 = vand.u32 %v102, 255
    %v231 = vand.u32 %v103, 255
    %v232 = vand.u32 %v104, 255
    %v233 = vand.u32 %v105, 255
    %v234 = vand.u32 %v106, 255
    %v235 = vand.u32 %v107, 255
    %v236 = vand.u32 %v108, 255
    %v237 = vand.u32 %v109, 255
    %v238 = vand.u32 %v110, 255
    %v239 = vand.u32 %v111, 255
    %v240 = vand.u32 %v112, 255
    %v241 = vand.u32 %v113, 255
    %v242 = vand.u32 %v114, 255
    %v243 = vand.u32 %v115, 255
    %v244 = vand.u32 %v116, 255
    %v245 = vand.u32 %v117, 255
    %v246 = vand.u32 %v118, 255
    %v247 = vand.u32 %v119, 255
    %v248 = vand.u32 %v120, 255
    %v249 = vand.u32 %v121, 255
    %v250 = vand.u32 %v122, 255
    %v251 = vand.u32 %v123, 255
    %v252 = vand.u32 %v124, 255
    %v253 = vand.u32 %v125, 255
    %v254 = vand.u32 %v126, 255
    %v255 = vand.u32 %v127, 255
    %v256 = vand.u32 %v128, 255
    %v257 = vand.u32 %v129, 255
    %v258 = vand.u32 %v130, 255
    %v259 = vand.u32 %v131, 255
    %v260 = vand.u32 %v132, 255
    %v261 = vand.u32 %v133, 255
    %v262 = vand.u32 %v134, 255
    %v263 = vand.u32 %v135, 255
    %v264 = vand.u32 %v136, 255
    %v265 = vand.u32 %v137, 255
    %v266 = vand.u32 %v138, 255
    %v267 = vand.u32 %v139, 255
    %v268 = vand.u32 %v140, 255
    %v269 = vand.u32 %v141, 255
    %v270 = vand.u32 %v142, 255
    %v271 = vand.u32 %v143, 255
    %v272 = vand.u32 %v144, 255
    %v273 = vand.u32 %v145, 255
    %v274 = vand.u32 %v146, 255
    %v275 = vand.u32 %v147, 255
    %v276 = vand.u32 %v148, 255
    %v277 = vand.u32 %v149, 255
    %v278 = vand.u32 %v150, 255
    %v279 = vand.u32 %v151, 255
    %v280 = vand.u32 %v152, 255
    %v281 = vand.u32 %v153, 255
    %v282 = vand.u32 %v154, 255
    %v283 = vand.u32 %v155, 255
    %v284 = vand.u32 %v156, 255
    %v285 = vand.u32 %v157, 255
    %v286 = vand.u32 %v158, 255
    %v287 = vand.u32 %v159, 255
    %v288 = vand.u32 %v160, 255
    %v289 = vand.u32 %v161, 255
    %v290 = vand.u32 %v162, 255
    %v291 = vand.u32 %v163, 255
    %v292 = vand.u32 %v164, 255
    %v293 = vand.u32 %v165, 255
    %v294 = vand.u32 %v166, 255
    %v295 = vand.u32 %v167, 255
    %v296 = vand.u32 %v168, 255
    %v297 = vand.u32 %v169, 255
    %v298 = vand.u32 %v170, 255
    %v299 = vand.u32 %v171, 255
    %v300 = vand.u32 %v172, 255
    %v301 = vand.u32 %v173, 255
    %v302 = vand.u32 %v174, 255
    %v303 = vand.u32 %v175, 255
    %v304 = vand.u32 %v176, 255
    %v305 = vand.u32 %v177, 255
    %v306 = vand.u32 %v178, 255
    %v307 = vand.u32 %v179, 255
    %v308 = vand.u32 %v180, 255
    %v309 = vand.u32 %v181, 255
    %v310 = vand.u32 %v182, 255
    %v311 = vcvt.s32.f32 %v183
    %v312 = vcvt.s32.f32 %v184
    %v313 = vcvt.s32.f32 %v185
    %v314 = vcvt.s32.f32 %v186
    %v315 = vcvt.s32.f32 %v187
    %v316 = vcvt.s32.f32 %v188
    %v317 = vcvt.s32.f32 %v189
    %v318 = vcvt.s32.f32 %v190
    %v319 = vcvt.s32.f32 %v191
    %v320 = vcvt.s32.f32 %v192
    %v321 = vcvt.s32.f32 %v193
    %v322 = vcvt.s32.f32 %v194
    %v323 = vcvt.s32.f32 %v195
    %v324 = vcvt.s32.f32 %v196
    %v325 = vcvt.s32.f32 %v197
    %v326 = vcvt.s32.f32 %v198
    %v327 = vcvt.s32.f32 %v199
    %v328 = vcvt.s32.f32 %v200
    %v329 = vcvt.s32.f32 %v201
    %v330 = vcvt.s32.f32 %v202
    %v331 = vcvt.s32.f32 %v203
    %v332 = vcvt.s32.f32 %v204
    %v333 = vcvt.s32.f32 %v205
    %v334 = vcvt.s32.f32 %v206
    %v335 = vcvt.s32.f32 %v207
    %v336 = vcvt.s32.f32 %v208
    %v337 = vcvt.s32.f32 %v209
    %v338 = vcvt.s32.f32 %v210
    %v339 = vcvt.s32.f32 %v211
    %v340 = vcvt.s32.f32 %v212
    %v341 = vcvt.s32.f32 %v213
    %v342 = vcvt.s32.f32 %v214
    %v343 = vcvt.s32.f32 %v215
    %v344 = vcvt.s32.f32 %v216
    %v345 = vcvt.s32.f32 %v217
    %v346 = vcvt.s32.f32 %v218
    %v347 = vcvt.s32.f32 %v219
    %v348 = vcvt.s32.f32 %v220
    %v349 = vcvt.s32.f32 %v221
    %v350 = vcvt.s32.f32 %v222
    %v351 = vcvt.s32.f32 %v223
    %v352 = vcvt.s32.f32 %v224
    %v353 = vcvt.s32.f32 %v225
    %v354 = vcvt.s32.f32 %v226
    %v355 = vcvt.s32.f32 %v227
    %v356 = vcvt.s32.f32 %v228
    %v357 = vcvt.s32.f32 %v229
    %v358 = vcvt.s32.f32 %v230
    %v359 = vcvt.s32.f32 %v231
    %v360 = vcvt.s32.f32 %v232
    %v361 = vcvt.s32.f32 %v233
    %v362 = vcvt.s32.f32 %v234
    %v363 = vcvt.s32.f32 %v235
    %v364 = vcvt.s32.f32 %v236
    %v365 = vcvt.s32.f32 %v237
    %v366 = vcvt.s32.f32 %v238
    %v367 = vcvt.s32.f32 %v239
    %v368 = vcvt.s32.f32 %v240
    %v369 = vcvt.s32.f32 %v241
    %v370 = vcvt.s32.f32 %v242
    %v371 = vcvt.s32.f32 %v243
    %v372 = vcvt.s32.f32 %v244
    %v373 = vcvt.s32.f32 %v245
    %v374 = vcvt.s32.f32 %v246
    %v375 = vcvt.s32.f32 %v247
    %v376 = vcvt.s32.f32 %v248
    %v377 = vcvt.s32.f32 %v249
    %v378 = vcvt.s32.f32 %v250
    %v379 = vcvt.s32.f32 %v251
    %v380 = vcvt.s32.f32 %v252
    %v381 = vcvt.s32.f32 %v253
    %v382 = vcvt.s32.f32 %v254
    %v383 = vcvt.s32.f32 %v255
    %v384 = vcvt.s32.f32 %v256
    %v385 = vcvt.s32.f32 %v257
    %v386 = vcvt.s32.f32 %v258
    %v387 = vcvt.s32.f32 %v259
    %v388 = vcvt.s32.f32 %v260
    %v389 = vcvt.s32.f32 %v261
    %v390 = vcvt.s32.f32 %v262
    %v391 = vcvt.s32.f32 %v263
    %v392 = vcvt.s32.f32 %v264
    %v393 = vcvt.s32.f32 %v265
    %v394 = vcvt.s32.f32 %v266
    %v395 = vcvt.s32.f32 %v267
    %v396 = vcvt.s32.f32 %v268
    %v397 = vcvt.s32.f32 %v269
    %v398 = vcvt.s32.f32 %v270
    %v399 = vcvt.s32.f32 %v271
    %v400 = vcvt.s32.f32 %v272
    %v401 = vcvt.s32.f32 %v273
    %v402 = vcvt.s32.f32 %v274
    %v403 = vcvt.s32.f32 %v275
    %v404 = vcvt.s32.f32 %v276
    %v405 = vcvt.s32.f32 %v277
    %v406 = vcvt.s32.f32 %v278
    %v407 = vcvt.s32.f32 %v279
    %v408 = vcvt.s32.f32 %v280
    %v409 = vcvt.s32.f32 %v281
    %v410 = vcvt.s32.f32 %v282
    %v411 = vcvt.s32.f32 %v283
    %v412 = vcvt.s32.f32 %v284
    %v413 = vcvt.s32.f32 %v285
    %v414 = vcvt.s32.f32 %v286
    %v415 = vcvt.s32.f32 %v287
    %v416 = vcvt.s32.f32 %v288
    %v417 = vcvt.s32.f32 %v289
    %v418 = vcvt.s32.f32 %v290
    %v419 = vcvt.s32.f32 %v291
    %v420 = vcvt.s32.f32 %v292
    %v421 = vcvt.s32.f32 %v293
    %v422 = vcvt.s32.f32 %v294
    %v423 = vcvt.s32.f32 %v295
    %v424 = vcvt.s32.f32 %v296
    %v425 = vcvt.s32.f32 %v297
    %v426 = vcvt.s32.f32 %v298
    %v427 = vcvt.s32.f32 %v299
    %v428 = vcvt.s32.f32 %v300
    %v429 = vcvt.s32.f32 %v301
    %v430 = vcvt.s32.f32 %v302
    %v431 = vcvt.s32.f32 %v303
    %v432 = vcvt.s32.f32 %v304
    %v433 = vcvt.s32.f32 %v305
    %v434 = vcvt.s32.f32 %v306
    %v435 = vcvt.s32.f32 %v307
    %v436 = vcvt.s32.f32 %v308
    %v437 = vcvt.s32.f32 %v309
    %v438 = vcvt.s32.f32 %v310
    %v439 = vmul.f32 %v311, 0.003921569
    %v440 = vmul.f32 %v312, 0.003921569
    %v441 = vmul.f32 %v313, 0.003921569
    %v442 = vmul.f32 %v314, 0.003921569
    %v443 = vmul.f32 %v315, 0.003921569
    %v444 = vmul.f32 %v316, 0.003921569
    %v445 = vmul.f32 %v317, 0.003921569
    %v446 = vmul.f32 %v318, 0.003921569
    %v447 = vmul.f32 %v319, 0.003921569
    %v448 = vmul.f32 %v320, 0.003921569
    %v449 = vmul.f32 %v321, 0.003921569
    %v450 = vmul.f32 %v322, 0.003921569
    %v451 = vmul.f32 %v323, 0.003921569
    %v452 = vmul.f32 %v324, 0.003921569
    %v453 = vmul.f32 %v325, 0.003921569
    %v454 = vmul.f32 %v326, 0.003921569
    %v455 = vmul.f32 %v327, 0.003921569
    %v456 = vmul.f32 %v328, 0.003921569
    %v457 = vmul.f32 %v329, 0.003921569
    %v458 = vmul.f32 %v330, 0.003921569
    %v459 = vmul.f32 %v331, 0.003921569
    %v460 = vmul.f32 %v332, 0.003921569
    %v461 = vmul.f32 %v333, 0.003921569
    %v462 = vmul.f32 %v334, 0.003921569
    %v463 = vmul.f32 %v335, 0.003921569
    %v464 = vmul.f32 %v336, 0.003921569
    %v465 = vmul.f32 %v337, 0.003921569
    %v466 = vmul.f32 %v338, 0.003921569
    %v467 = vmul.f32 %v339, 0.003921569
    %v468 = vmul.f32 %v340, 0.003921569
    %v469 = vmul.f32 %v341, 0.003921569
    %v470 = vmul.f32 %v342, 0.003921569
    %v471 = vmul.f32 %v343, 0.003921569
    %v472 = vmul.f32 %v344, 0.003921569
    %v473 = vmul.f32 %v345, 0.003921569
    %v474 = vmul.f32 %v346, 0.003921569
    %v475 = vmul.f32 %v347, 0.003921569
    %v476 = vmul.f32 %v348, 0.003921569
    %v477 = vmul.f32 %v349, 0.003921569
    %v478 = vmul.f32 %v350, 0.003921569
    %v479 = vmul.f32 %v351, 0.003921569
    %v480 = vmul.f32 %v352, 0.003921569
    %v481 = vmul.f32 %v353, 0.003921569
    %v482 = vmul.f32 %v354, 0.003921569
    %v483 = vmul.f32 %v355, 0.003921569
    %v484 = vmul.f32 %v356, 0.003921569
    %v485 = vmul.f32 %v357, 0.003921569
    %v486 = vmul.f32 %v358, 0.003921569
    %v487 = vmul.f32 %v359, 0.003921569
    %v488 = vmul.f32 %v360, 0.003921569
    %v489 = vmul.f32 %v361, 0.003921569
    %v490 = vmul.f32 %v362, 0.003921569
    %v491 = vmul.f32 %v363, 0.003921569
    %v492 = vmul.f32 %v364, 0.003921569
    %v493 = vmul.f32 %v365, 0.003921569
    %v494 = vmul.f32 %v366, 0.003921569
    %v495 = vmul.f32 %v367, 0.003921569
    %v496 = vmul.f32 %v368, 0.003921569
    %v497 = vmul.f32 %v369, 0.003921569
    %v498 = vmul.f32 %v370, 0.003921569
    %v499 = vmul.f32 %v371, 0.003921569
    %v500 = vmul.f32 %v372, 0.003921569
    %v501 = vmul.f32 %v373, 0.003921569
    %v502 = vmul.f32 %v374, 0.003921569
    %v503 = vmul.f32 %v375, 0.003921569
    %v504 = vmul.f32 %v376, 0.003921569
    %v505 = vmul.f32 %v377, 0.003921569
    %v506 = vmul.f32 %v378, 0.003921569
    %v507 = vmul.f32 %v379, 0.003921569
    %v508 = vmul.f32 %v380, 0.003921569
    %v509 = vmul.f32 %v381, 0.003921569
    %v510 = vmul.f32 %v382, 0.003921569
    %v511 = vmul.f32 %v383, 0.003921569
    %v512 = vmul.f32 %v384, 0.003921569
    %v513 = vmul.f32 %v385, 0.003921569
    %v514 = vmul.f32 %v386, 0.003921569
    %v515 = vmul.f32 %v387, 0.003921569
    %v516 = vmul.f32 %v388, 0.003921569
    %v517 = vmul.f32 %v389, 0.003921569
    %v518 = vmul.f32 %v390, 0.003921569
    %v519 = vmul.f32 %v391, 0.003921569
    %v520 = vmul.f32 %v392, 0.003921569
    %v521 = vmul.f32 %v393, 0.003921569
    %v522 = vmul.f32 %v394, 0.003921569
    %v523 = vmul.f32 %v395, 0.003921569
    %v524 = vmul.f32 %v396, 0.003921569
    %v525 = vmul.f32 %v397, 0.003921569
    %v526 = vmul.f32 %v398, 0.003921569
    %v527 = vmul.f32 %v399, 0.003921569
    %v528 = vmul.f32 %v400, 0.003921569
    %v529 = vmul.f32 %v401, 0.003921569
    %v530 = vmul.f32 %v402, 0.003921569
    %v531 = vmul.f32 %v403, 0.003921569
    %v532 = vmul.f32 %v404, 0.003921569
    %v533 = vmul.f32 %v405, 0.003921569
    %v534 = vmul.f32 %v406, 0.003921569
    %v535 = vmul.f32 %v407, 0.003921569
    %v536 = vmul.f32 %v408, 0.003921569
    %v537 = vmul.f32 %v409, 0.003921569
    %v538 = vmul.f32 %v410, 0.003921569
    %v539 = vmul.f32 %v411, 0.003921569
    %v540 = vmul.f32 %v412, 0.003921569
    %v541 = vmul.f32 %v413, 0.003921569
    %v542 = vmul.f32 %v414, 0.003921569
    %v543 = vmul.f32 %v415, 0.003921569
    %v544 = vmul.f32 %v416, 0.003921569
    %v545 = vmul.f32 %v417, 0.003921569
    %v546 = vmul.f32 %v418, 0.003921569
    %v547 = vmul.f32 %v419, 0.003921569
    %v548 = vmul.f32 %v420, 0.003921569
    %v549 = vmul.f32 %v421, 0.003921569
    %v550 = vmul.f32 %v422, 0.003921569
    %v551 = vmul.f32 %v423, 0.003921569
    %v552 = vmul.f32 %v424, 0.003921569
    %v553 = vmul.f32 %v425, 0.003921569
    %v554 = vmul.f32 %v426, 0.003921569
    %v555 = vmul.f32 %v427, 0.003921569
    %v556 = vmul.f32 %v428, 0.003921569
    %v557 = vmul.f32 %v429, 0.003921569
    %v558 = vmul.f32 %v430, 0.003921569
    %v559 = vmul.f32 %v431, 0.003921569
    %v560 = vmul.f32 %v432, 0.003921569
    %v561 = vmul.f32 %v433, 0.003921569
    %v562 = vmul.f32 %v434, 0.003921569
    %v563 = vmul.f32 %v435, 0.003921569
    %v564 = vmul.f32 %v436, 0.003921569
    %v565 = vmul.f32 %v437, 0.003921569
    %v566 = vmul.f32 %v438, 0.003921569
    %567 = vst [vmem:[#allocation5] sm:$0xff] %v439
    %568 = vst [vmem:[#allocation5 + $0x8] sm:$0xff] %v440
    %569 = vst [vmem:[#allocation5 + $0x10] sm:$0xff] %v441
    %570 = vst [vmem:[#allocation5 + $0x18] sm:$0xff] %v442
    %571 = vst [vmem:[#allocation5 + $0x20] sm:$0xff] %v443
    %572 = vst [vmem:[#allocation5 + $0x28] sm:$0xff] %v444
    %573 = vst [vmem:[#allocation5 + $0x30] sm:$0xff] %v445
    %574 = vst [vmem:[#allocation5 + $0x38] sm:$0xff] %v446
    %575 = vst [vmem:[#allocation5 + $0x40] sm:$0xff] %v447
    %576 = vst [vmem:[#allocation5 + $0x48] sm:$0xff] %v448
    %577 = vst [vmem:[#allocation5 + $0x50] sm:$0xff] %v449
    %578 = vst [vmem:[#allocation5 + $0x58] sm:$0xff] %v450
    %579 = vst [vmem:[#allocation5 + $0x60] sm:$0xff] %v451
    %580 = vst [vmem:[#allocation5 + $0x68] sm:$0xff] %v452
    %581 = vst [vmem:[#allocation5 + $0x70] sm:$0xff] %v453
    %582 = vst [vmem:[#allocation5 + $0x78] sm:$0xff] %v454
    %583 = vst [vmem:[#allocation5 + $0x80] sm:$0xff] %v455
    %584 = vst [vmem:[#allocation5 + $0x88] sm:$0xff] %v456
    %585 = vst [vmem:[#allocation5 + $0x90] sm:$0xff] %v457
    %586 = vst [vmem:[#allocation5 + $0x98] sm:$0xff] %v458
    %587 = vst [vmem:[#allocation5 + $0xa0] sm:$0xff] %v459
    %588 = vst [vmem:[#allocation5 + $0xa8] sm:$0xff] %v460
    %589 = vst [vmem:[#allocation5 + $0xb0] sm:$0xff] %v461
    %590 = vst [vmem:[#allocation5 + $0xb8] sm:$0xff] %v462
    %591 = vst [vmem:[#allocation5 + $0xc0] sm:$0xff] %v463
    %592 = vst [vmem:[#allocation5 + $0xc8] sm:$0xff] %v464
    %593 = vst [vmem:[#allocation5 + $0xd0] sm:$0xff] %v465
    %594 = vst [vmem:[#allocation5 + $0xd8] sm:$0xff] %v466
    %595 = vst [vmem:[#allocation5 + $0xe0] sm:$0xff] %v467
    %596 = vst [vmem:[#allocation5 + $0xe8] sm:$0xff] %v468
    %597 = vst [vmem:[#allocation5 + $0xf0] sm:$0xff] %v469
    %598 = vst [vmem:[#allocation5 + $0xf8] sm:$0xff] %v470
    %599 = vst [vmem:[#allocation5 + $0x100] sm:$0xff] %v471
    %600 = vst [vmem:[#allocation5 + $0x108] sm:$0xff] %v472
    %601 = vst [vmem:[#allocation5 + $0x110] sm:$0xff] %v473
    %602 = vst [vmem:[#allocation5 + $0x118] sm:$0xff] %v474
    %603 = vst [vmem:[#allocation5 + $0x120] sm:$0xff] %v475
    %604 = vst [vmem:[#allocation5 + $0x128] sm:$0xff] %v476
    %605 = vst [vmem:[#allocation5 + $0x130] sm:$0xff] %v477
    %606 = vst [vmem:[#allocation5 + $0x138] sm:$0xff] %v478
    %607 = vst [vmem:[#allocation5 + $0x140] sm:$0xff] %v479
    %608 = vst [vmem:[#allocation5 + $0x148] sm:$0xff] %v480
    %609 = vst [vmem:[#allocation5 + $0x150] sm:$0xff] %v481
    %610 = vst [vmem:[#allocation5 + $0x158] sm:$0xff] %v482
    %611 = vst [vmem:[#allocation5 + $0x160] sm:$0xff] %v483
    %612 = vst [vmem:[#allocation5 + $0x168] sm:$0xff] %v484
    %613 = vst [vmem:[#allocation5 + $0x170] sm:$0xff] %v485
    %614 = vst [vmem:[#allocation5 + $0x178] sm:$0xff] %v486
    %615 = vst [vmem:[#allocation5 + $0x180] sm:$0xff] %v487
    %616 = vst [vmem:[#allocation5 + $0x188] sm:$0xff] %v488
    %617 = vst [vmem:[#allocation5 + $0x190] sm:$0xff] %v489
    %618 = vst [vmem:[#allocation5 + $0x198] sm:$0xff] %v490
    %619 = vst [vmem:[#allocation5 + $0x1a0] sm:$0xff] %v491
    %620 = vst [vmem:[#allocation5 + $0x1a8] sm:$0xff] %v492
    %621 = vst [vmem:[#allocation5 + $0x1b0] sm:$0xff] %v493
    %622 = vst [vmem:[#allocation5 + $0x1b8] sm:$0xff] %v494
    %623 = vst [vmem:[#allocation5 + $0x1c0] sm:$0xff] %v495
    %624 = vst [vmem:[#allocation5 + $0x1c8] sm:$0xff] %v496
    %625 = vst [vmem:[#allocation5 + $0x1d0] sm:$0xff] %v497
    %626 = vst [vmem:[#allocation5 + $0x1d8] sm:$0xff] %v498
    %627 = vst [vmem:[#allocation5 + $0x1e0] sm:$0xff] %v499
    %628 = vst [vmem:[#allocation5 + $0x1e8] sm:$0xff] %v500
    %629 = vst [vmem:[#allocation5 + $0x1f0] sm:$0xff] %v501
    %630 = vst [vmem:[#allocation5 + $0x1f8] sm:$0xff] %v502
    %631 = vst [vmem:[#allocation5 + $0x200] sm:$0xff] %v503
    %632 = vst [vmem:[#allocation5 + $0x208] sm:$0xff] %v504
    %633 = vst [vmem:[#allocation5 + $0x210] sm:$0xff] %v505
    %634 = vst [vmem:[#allocation5 + $0x218] sm:$0xff] %v506
    %635 = vst [vmem:[#allocation5 + $0x220] sm:$0xff] %v507
    %636 = vst [vmem:[#allocation5 + $0x228] sm:$0xff] %v508
    %637 = vst [vmem:[#allocation5 + $0x230] sm:$0xff] %v509
    %638 = vst [vmem:[#allocation5 + $0x238] sm:$0xff] %v510
    %639 = vst [vmem:[#allocation5 + $0x240] sm:$0xff] %v511
    %640 = vst [vmem:[#allocation5 + $0x248] sm:$0xff] %v512
    %641 = vst [vmem:[#allocation5 + $0x250] sm:$0xff] %v513
    %642 = vst [vmem:[#allocation5 + $0x258] sm:$0xff] %v514
    %643 = vst [vmem:[#allocation5 + $0x260] sm:$0xff] %v515
    %644 = vst [vmem:[#allocation5 + $0x268] sm:$0xff] %v516
    %645 = vst [vmem:[#allocation5 + $0x270] sm:$0xff] %v517
    %646 = vst [vmem:[#allocation5 + $0x278] sm:$0xff] %v518
    %647 = vst [vmem:[#allocation5 + $0x280] sm:$0xff] %v519
    %648 = vst [vmem:[#allocation5 + $0x288] sm:$0xff] %v520
    %649 = vst [vmem:[#allocation5 + $0x290] sm:$0xff] %v521
    %650 = vst [vmem:[#allocation5 + $0x298] sm:$0xff] %v522
    %651 = vst [vmem:[#allocation5 + $0x2a0] sm:$0xff] %v523
    %652 = vst [vmem:[#allocation5 + $0x2a8] sm:$0xff] %v524
    %653 = vst [vmem:[#allocation5 + $0x2b0] sm:$0xff] %v525
    %654 = vst [vmem:[#allocation5 + $0x2b8] sm:$0xff] %v526
    %655 = vst [vmem:[#allocation5 + $0x2c0] sm:$0xff] %v527
    %656 = vst [vmem:[#allocation5 + $0x2c8] sm:$0xff] %v528
    %657 = vst [vmem:[#allocation5 + $0x2d0] sm:$0xff] %v529
    %658 = vst [vmem:[#allocation5 + $0x2d8] sm:$0xff] %v530
    %659 = vst [vmem:[#allocation5 + $0x2e0] sm:$0xff] %v531
    %660 = vst [vmem:[#allocation5 + $0x2e8] sm:$0xff] %v532
    %661 = vst [vmem:[#allocation5 + $0x2f0] sm:$0xff] %v533
    %662 = vst [vmem:[#allocation5 + $0x2f8] sm:$0xff] %v534
    %663 = vst [vmem:[#allocation5 + $0x300] sm:$0xff] %v535
    %664 = vst [vmem:[#allocation5 + $0x308] sm:$0xff] %v536
    %665 = vst [vmem:[#allocation5 + $0x310] sm:$0xff] %v537
    %666 = vst [vmem:[#allocation5 + $0x318] sm:$0xff] %v538
    %667 = vst [vmem:[#allocation5 + $0x320] sm:$0xff] %v539
    %668 = vst [vmem:[#allocation5 + $0x328] sm:$0xff] %v540
    %669 = vst [vmem:[#allocation5 + $0x330] sm:$0xff] %v541
    %670 = vst [vmem:[#allocation5 + $0x338] sm:$0xff] %v542
    %671 = vst [vmem:[#allocation5 + $0x340] sm:$0xff] %v543
    %672 = vst [vmem:[#allocation5 + $0x348] sm:$0xff] %v544
    %673 = vst [vmem:[#allocation5 + $0x350] sm:$0xff] %v545
    %674 = vst [vmem:[#allocation5 + $0x358] sm:$0xff] %v546
    %675 = vst [vmem:[#allocation5 + $0x360] sm:$0xff] %v547
    %676 = vst [vmem:[#allocation5 + $0x368] sm:$0xff] %v548
    %677 = vst [vmem:[#allocation5 + $0x370] sm:$0xff] %v549
    %678 = vst [vmem:[#allocation5 + $0x378] sm:$0xff] %v550
    %679 = vst [vmem:[#allocation5 + $0x380] sm:$0xff] %v551
    %680 = vst [vmem:[#allocation5 + $0x388] sm:$0xff] %v552
    %681 = vst [vmem:[#allocation5 + $0x390] sm:$0xff] %v553
    %682 = vst [vmem:[#allocation5 + $0x398] sm:$0xff] %v554
    %683 = vst [vmem:[#allocation5 + $0x3a0] sm:$0xff] %v555
    %684 = vst [vmem:[#allocation5 + $0x3a8] sm:$0xff] %v556
    %685 = vst [vmem:[#allocation5 + $0x3b0] sm:$0xff] %v557
    %686 = vst [vmem:[#allocation5 + $0x3b8] sm:$0xff] %v558
    %687 = vst [vmem:[#allocation5 + $0x3c0] sm:$0xff] %v559
    %688 = vst [vmem:[#allocation5 + $0x3c8] sm:$0xff] %v560
    %689 = vst [vmem:[#allocation5 + $0x3d0] sm:$0xff] %v561
    %690 = vst [vmem:[#allocation5 + $0x3d8] sm:$0xff] %v562
    %691 = vst [vmem:[#allocation5 + $0x3e0] sm:$0xff] %v563
    %692 = vst [vmem:[#allocation5 + $0x3e8] sm:$0xff] %v564
    %693 = vst [vmem:[#allocation5 + $0x3f0] sm:$0xff] %v565
    %694 = vst [vmem:[#allocation5 + $0x3f8] sm:$0xff] %v566
    // Predicated region
    $region10: #{tpu_custom_call.1} parent=1 // pred_check
      _
    $region11: #{tpu_custom_call.1} parent=1 // pred_check_branch
      %696 = sbr.rel (0) target = $region13
    $region12: #{tpu_custom_call.1} parent=1 // pred_region
      %s698 = ssub.s32 16384, 16384
      %699 = vsyncadd [#allocation4], %s698
      %s700 = sshll.u32 [#allocation5], 4
      %s701 = int_to_ptr.vmem [resolvable:$true] %s700
      %706 = dma.vmem_to_hbm [thread:$0]  %s701, 16384, %s1, [#allocation4], 512, 512, 32
    $region13: #{tpu_custom_call.1} parent=1 // pred_fallthru
      _
    // Predicated region
    $region14: #{tpu_custom_call.1} parent=1 // pred_check
      _
    $region15: #{tpu_custom_call.1} parent=1 // pred_check_branch
      %708 = sbr.rel (0) target = $region17
    $region16: #{tpu_custom_call.1} parent=1 // pred_region
      %709 = dma.done [#allocation4], 16384
    $region17: #{tpu_custom_call.1} parent=1 // pred_fallthru
      _
    %710 = vsyncpa [#allocation3], 1
    %711 = vsyncpa [#allocation4], 1

</llo_original>
